<compile_context>
chip_gen: v7x
topology: tpu7x:2x2x1
jax: 0.10.0
libtpu: 0.0.40
codegen_flags: <defaults>
</compile_context>

<pallas_src>
import jax
import jax.numpy as jnp
from jax.experimental import pallas as pl
from jax.experimental.pallas import tpu as pltpu

BN_EPS = 1e-5


def _round_up(v, m):
    return (v + m - 1) // m * m


def _pick_row_tile(rows):
    """Largest row tile from the candidate list that divides `rows`."""
    if rows % 8 != 0:
        return rows
    for cand in (1024, 512, 256, 128, 64, 32, 16, 8):
        if rows % cand == 0:
            return cand
    return rows


def _vmem_budget(block_bytes):
    """Explicit scoped-VMEM budget, clamped below v7x's 64 MiB physical."""
    return int(min(48 * 1024 * 1024, max(16 * 1024 * 1024, block_bytes)))


# ----------------------------------------------------------------------------
# Pass 1: per-batch Linear + fused (A + I)/deg operator + partial BN stats
# ----------------------------------------------------------------------------
def gcn_pass1_kernel(x_ref, adj_ref, wT_ref, h_ref, stats_ref):
    # x_ref:    (N, Dk)   -- Dk = Din + 1 (ones column folds the Linear bias)
    # adj_ref:  (N, N)
    # wT_ref:   (Dk, Dp)  -- resident across the B grid axis
    # h_ref:    (N, Dp)   -- pre-BN activations for this batch
    # stats_ref:(2, Dp)   -- row 0: sum over N, row 1: sum of squares over N
    n = adj_ref.shape[0]

    # --- nn.Linear (bias folded into the matmul) ---
    h = jnp.dot(x_ref[...], wT_ref[...],
                preferred_element_type=jnp.float32)            # (N, Dp)

    # --- fused residual + degree normalization: A_hat = (A + I) * (1/deg) ---
    adj = adj_ref[...]                                         # (N, N)
    deg = jnp.sum(adj, axis=1, keepdims=True) + 1.0            # (N, 1)
    rows = jax.lax.broadcasted_iota(jnp.int32, (n, n), 0)
    cols = jax.lax.broadcasted_iota(jnp.int32, (n, n), 1)
    eye = (rows == cols).astype(jnp.float32)
    a_hat = (adj + eye) * (1.0 / deg)                          # O(N^2) work

    # A_hat @ h  ==  (h + A @ h) / deg, as one MXU matmul
    h = jnp.dot(a_hat, h, preferred_element_type=jnp.float32)  # (N, Dp)

    h_ref[...] = h
    stats_ref[0:1, :] = jnp.sum(h, axis=0, keepdims=True)       # (1, Dp)
    stats_ref[1:2, :] = jnp.sum(h * h, axis=0, keepdims=True)   # (1, Dp)


# ----------------------------------------------------------------------------
# Pass 2: streaming fused BatchNorm affine + ReLU
# ----------------------------------------------------------------------------
def gcn_pass2_kernel(h_ref, scale_ref, shift_ref, out_ref):
    # h_ref: (TR, Dp)   scale/shift: (1, Dp)   out: (TR, Dp)
    out_ref[...] = jnp.maximum(h_ref[...] * scale_ref[...] + shift_ref[...],
                               0.0)


@jax.jit
def gcn_forward(x, adj, w, b, gamma, beta):
    B, N, Din = x.shape
    Dout = w.shape[0]
    Dp = _round_up(Dout, 128)          # lane-dense (padded) feature dim
    pad = Dp - Dout
    Dk = Din + 1                       # ones column folds the Linear bias

    # --- wrapper-side layout plumbing (pure JAX, tiny) ---
    x_aug = jnp.concatenate(
        [x.astype(jnp.float32), jnp.ones((B, N, 1), jnp.float32)], axis=-1)
    wT = jnp.concatenate([jnp.transpose(w), b[None, :]], axis=0)   # (Dk, Dout)
    wT = jnp.pad(wT, ((0, 0), (0, pad)))                           # (Dk, Dp)

    # ---------------- Pass 1: gridded over B ----------------
    p1_block_bytes = 4 * (2 * (N * Dk + N * N)       # double-buffered inputs
                          + Dk * Dp                  # resident weights
                          + 2 * (N * Dp + 8 * Dp)    # double-buffered outputs
                          + 3 * N * Dp + 2 * N * N)  # intermediates
    p1_flops = B * (2 * N * Dk * Dp + 2 * N * N * Dp + 3 * N * N + 3 * N * Dp)
    p1_bytes = 4 * (B * N * Dk + B * N * N + Dk * Dp
                    + B * N * Dp + B * 2 * Dp)

    h_pre, stats = pl.pallas_call(
        gcn_pass1_kernel,
        out_shape=(jax.ShapeDtypeStruct((B, N, Dp), jnp.float32),
                   jax.ShapeDtypeStruct((B, 2, Dp), jnp.float32)),
        grid=(B,),
        in_specs=[
            pl.BlockSpec((None, N, Dk), lambda bb: (bb, 0, 0)),  # x (per batch)
            pl.BlockSpec((None, N, N), lambda bb: (bb, 0, 0)),   # adj (streamed)
            pl.BlockSpec((Dk, Dp), lambda bb: (0, 0)),           # W^T (resident)
        ],
        out_specs=(
            pl.BlockSpec((None, N, Dp), lambda bb: (bb, 0, 0)),  # h_pre
            pl.BlockSpec((None, 2, Dp), lambda bb: (bb, 0, 0)),  # partial stats
        ),
        compiler_params=pltpu.CompilerParams(
            dimension_semantics=("parallel",),
            vmem_limit_bytes=_vmem_budget(2 * p1_block_bytes)),
        cost_estimate=pl.CostEstimate(
            flops=p1_flops, transcendentals=B * N, bytes_accessed=p1_bytes),
    )(x_aug, adj.astype(jnp.float32), wT)

    # --- tiny BN statistics finalization in plain JAX (O(Dp) work) ---
    n_rows = B * N
    s1 = jnp.sum(stats[:, 0, :], axis=0)                        # (Dp,)
    s2 = jnp.sum(stats[:, 1, :], axis=0)                        # (Dp,)
    mean = s1 / n_rows
    var = jnp.maximum(s2 / n_rows - mean * mean, 0.0)           # biased var
    gamma_p = jnp.pad(gamma, (0, pad))
    beta_p = jnp.pad(beta, (0, pad))
    scale = gamma_p * jax.lax.rsqrt(var + BN_EPS)               # (Dp,)
    shift = beta_p - mean * scale                               # (Dp,)
    scale2 = scale.reshape(1, Dp)
    shift2 = shift.reshape(1, Dp)

    # ---------------- Pass 2: row-tiled normalize + relu ----------------
    h2 = h_pre.reshape(n_rows, Dp)      # contiguous reshape (layout-trivial)
    TR = _pick_row_tile(n_rows)
    p2_block_bytes = 4 * (2 * 2 * TR * Dp + 2 * Dp)
    p2_flops = 3 * n_rows * Dp
    p2_bytes = 4 * (2 * n_rows * Dp + 2 * Dp)

    out2 = pl.pallas_call(
        gcn_pass2_kernel,
        out_shape=jax.ShapeDtypeStruct((n_rows, Dp), jnp.float32),
        grid=(n_rows // TR,),
        in_specs=[
            pl.BlockSpec((TR, Dp), lambda i: (i, 0)),
            pl.BlockSpec((1, Dp), lambda i: (0, 0)),
            pl.BlockSpec((1, Dp), lambda i: (0, 0)),
        ],
        out_specs=pl.BlockSpec((TR, Dp), lambda i: (i, 0)),
        compiler_params=pltpu.CompilerParams(
            dimension_semantics=("parallel",),
            vmem_limit_bytes=_vmem_budget(2 * p2_block_bytes)),
        cost_estimate=pl.CostEstimate(
            flops=p2_flops, transcendentals=0, bytes_accessed=p2_bytes),
    )(h2, scale2, shift2)

    # Drop padded lanes, restore (B, N, Dout) layout outside the kernel.
    return out2[:, :Dout].reshape(B, N, Dout)


def ref_forward(x, adj, w, b, gamma, beta):
    """Pure-JAX reference mirroring the PyTorch module (training-mode BN)."""
    h = jnp.einsum("bni,oi->bno", x, w) + b
    h = h + jnp.einsum("bnm,bmd->bnd", adj, h)
    deg = adj.sum(axis=2, keepdims=True) + 1.0
    h = h / deg
    B, N, D = h.shape
    h2 = h.reshape(B * N, D)
    mean = h2.mean(axis=0)
    var = ((h2 - mean) ** 2).mean(axis=0)
    h2 = (h2 - mean) / jnp.sqrt(var + BN_EPS) * gamma + beta
    return jnp.maximum(h2.reshape(B, N, D), 0.0)


if __name__ == "__main__":
    B, N, Din, Dout = 2, 16, 8, 32

    key = jax.random.PRNGKey(0)
    kx, kadj, kw, kb = jax.random.split(key, 4)

    x = jax.random.normal(kx, (B, N, Din), dtype=jnp.float32)
    # random 0/1 adjacency as float32 (non-symmetric is fine for the math)
    adj = (jax.random.uniform(kadj, (B, N, N)) < 0.3).astype(jnp.float32)

    # nn.Linear params: xavier_normal_ weight, default uniform bias
    xavier_std = (2.0 / (Din + Dout)) ** 0.5
    w = xavier_std * jax.random.normal(kw, (Dout, Din), dtype=jnp.float32)
    bound = 1.0 / (Din ** 0.5)
    b = jax.random.uniform(kb, (Dout,), minval=-bound, maxval=bound,
                           dtype=jnp.float32)

    # BatchNorm1d default affine params
    gamma = jnp.ones((Dout,), dtype=jnp.float32)
    beta = jnp.zeros((Dout,), dtype=jnp.float32)

    out = gcn_forward(x, adj, w, b, gamma, beta)
    out = jax.block_until_ready(out)

    ref = ref_forward(x, adj, w, b, gamma, beta)
    assert out.shape == (B, N, Dout)
    assert jnp.allclose(out, ref, atol=1e-4, rtol=1e-4), "mismatch vs reference"

    print("KERNEL_OK")
</pallas_src>

<mosaic_0001>
module attributes {stable_mosaic.version = 11 : i64} {
  func.func @gcn_pass1_kernel(%arg0: i32, %arg1: memref<1x16x9xf32, #tpu.memory_space<vmem>>, %arg2: memref<1x16x16xf32, #tpu.memory_space<vmem>>, %arg3: memref<9x128xf32, #tpu.memory_space<vmem>>, %arg4: memref<1x16x128xf32, #tpu.memory_space<vmem>>, %arg5: memref<1x2x128xf32, #tpu.memory_space<vmem>>) attributes {dimension_semantics = [#tpu.dimension_semantics<parallel>], iteration_bounds = array<i64: 2>, scalar_prefetch = 0 : i64, scratch_operands = 0 : i64, tpu.core_type = #tpu.core_type<tc>, window_params = [{transform_indices = @transform_0, window_bounds = array<i64: 1, 16, 9>}, {transform_indices = @transform_1, window_bounds = array<i64: 1, 16, 16>}, {pipeline_mode = #tpu.pipeline_mode<synchronous>, transform_indices = @transform_2, window_bounds = array<i64: 9, 128>}, {transform_indices = @transform_3, window_bounds = array<i64: 1, 16, 128>}, {transform_indices = @transform_4, window_bounds = array<i64: 1, 2, 128>}]} {
    %c0 = arith.constant 0 : index
    %c0_0 = arith.constant 0 : index
    %c0_1 = arith.constant 0 : index
    %0 = vector.load %arg1[%c0, %c0_0, %c0_1] : memref<1x16x9xf32, #tpu.memory_space<vmem>>, vector<1x16x9xf32>
    %1 = vector.shape_cast %0 : vector<1x16x9xf32> to vector<16x9xf32>
    %c0_2 = arith.constant 0 : index
    %c0_3 = arith.constant 0 : index
    %2 = vector.load %arg3[%c0_2, %c0_3] : memref<9x128xf32, #tpu.memory_space<vmem>>, vector<9x128xf32>
    %cst = arith.constant dense<0.000000e+00> : vector<16x128xf32>
    %3 = tpu.matmul %1, %2, %cst {dimension_numbers = #tpu.dot_dimension_numbers<[1], [0], [0], [1], [0, 0, 1, 1], [], []>} : vector<16x9xf32>, vector<9x128xf32>, vector<16x128xf32> -> vector<16x128xf32>
    %c0_4 = arith.constant 0 : index
    %c0_5 = arith.constant 0 : index
    %c0_6 = arith.constant 0 : index
    %4 = vector.load %arg2[%c0_4, %c0_5, %c0_6] : memref<1x16x16xf32, #tpu.memory_space<vmem>>, vector<1x16x16xf32>
    %5 = vector.shape_cast %4 : vector<1x16x16xf32> to vector<16x16xf32>
    %cst_7 = arith.constant dense<0.000000e+00> : vector<16xf32>
    %6 = vector.multi_reduction <add>, %5, %cst_7 [1] : vector<16x16xf32> to vector<16xf32>
    %7 = vector.shape_cast %6 : vector<16xf32> to vector<16x1xf32>
    %cst_8 = arith.constant 1.000000e+00 : f32
    %8 = vector.broadcast %cst_8 : f32 to vector<16x1xf32>
    %9 = arith.addf %7, %8 : vector<16x1xf32>
    %10 = tpu.iota {dimensions = array<i32: 0>} : vector<16x16xi32>
    %11 = tpu.iota {dimensions = array<i32: 1>} : vector<16x16xi32>
    %12 = arith.cmpi eq, %10, %11 : vector<16x16xi32>
    %13 = arith.extui %12 : vector<16x16xi1> to vector<16x16xi32>
    %14 = arith.sitofp %13 : vector<16x16xi32> to vector<16x16xf32>
    %15 = arith.addf %5, %14 : vector<16x16xf32>
    %cst_9 = arith.constant 1.000000e+00 : f32
    %16 = vector.broadcast %cst_9 : f32 to vector<16x1xf32>
    %17 = arith.divf %16, %9 : vector<16x1xf32>
    %18 = vector.broadcast %17 : vector<16x1xf32> to vector<16x16xf32>
    %19 = arith.mulf %15, %18 : vector<16x16xf32>
    %cst_10 = arith.constant dense<0.000000e+00> : vector<16x128xf32>
    %20 = tpu.matmul %19, %3, %cst_10 {dimension_numbers = #tpu.dot_dimension_numbers<[1], [0], [0], [1], [0, 0, 1, 1], [], []>} : vector<16x16xf32>, vector<16x128xf32>, vector<16x128xf32> -> vector<16x128xf32>
    %c0_11 = arith.constant 0 : index
    %c0_12 = arith.constant 0 : index
    %c0_13 = arith.constant 0 : index
    %21 = vector.load %arg4[%c0_11, %c0_12, %c0_13] : memref<1x16x128xf32, #tpu.memory_space<vmem>>, vector<1x16x128xf32>
    %22 = vector.shape_cast %21 : vector<1x16x128xf32> to vector<16x128xf32>
    %23 = vector.shape_cast %20 : vector<16x128xf32> to vector<1x16x128xf32>
    tpu.vector_store %arg4[%c0_11, %c0_12, %c0_13], %23 {strides = array<i32>} : memref<1x16x128xf32, #tpu.memory_space<vmem>>, vector<1x16x128xf32>,
    %cst_14 = arith.constant dense<0.000000e+00> : vector<128xf32>
    %24 = vector.multi_reduction <add>, %20, %cst_14 [0] : vector<16x128xf32> to vector<128xf32>
    %25 = vector.shape_cast %24 : vector<128xf32> to vector<1x128xf32>
    %c0_15 = arith.constant 0 : index
    %c0_16 = arith.constant 0 : index
    %c0_17 = arith.constant 0 : index
    %26 = vector.load %arg5[%c0_15, %c0_16, %c0_17] : memref<1x2x128xf32, #tpu.memory_space<vmem>>, vector<1x1x128xf32>
    %27 = vector.shape_cast %26 : vector<1x1x128xf32> to vector<1x128xf32>
    %28 = vector.shape_cast %25 : vector<1x128xf32> to vector<1x1x128xf32>
    tpu.vector_store %arg5[%c0_15, %c0_16, %c0_17], %28 {strides = array<i32>} : memref<1x2x128xf32, #tpu.memory_space<vmem>>, vector<1x1x128xf32>,
    %29 = arith.mulf %20, %20 : vector<16x128xf32>
    %cst_18 = arith.constant dense<0.000000e+00> : vector<128xf32>
    %30 = vector.multi_reduction <add>, %29, %cst_18 [0] : vector<16x128xf32> to vector<128xf32>
    %31 = vector.shape_cast %30 : vector<128xf32> to vector<1x128xf32>
    %c0_19 = arith.constant 0 : index
    %c1 = arith.constant 1 : index
    %c0_20 = arith.constant 0 : index
    %32 = vector.load %arg5[%c0_19, %c1, %c0_20] : memref<1x2x128xf32, #tpu.memory_space<vmem>>, vector<1x1x128xf32>
    %33 = vector.shape_cast %32 : vector<1x1x128xf32> to vector<1x128xf32>
    %34 = vector.shape_cast %31 : vector<1x128xf32> to vector<1x1x128xf32>
    tpu.vector_store %arg5[%c0_19, %c1, %c0_20], %34 {strides = array<i32>} : memref<1x2x128xf32, #tpu.memory_space<vmem>>, vector<1x1x128xf32>,
    return
  }
  func.func @transform_0(%arg0: i32) -> (i32, i32, i32) {
    %c0_i32 = arith.constant 0 : i32
    %c0_i32_0 = arith.constant 0 : i32
    %c0_i32_1 = arith.constant 0 : i32
    return %arg0, %c0_i32, %c0_i32_0 : i32, i32, i32
  }
  func.func @transform_1(%arg0: i32) -> (i32, i32, i32) {
    %c0_i32 = arith.constant 0 : i32
    %c0_i32_0 = arith.constant 0 : i32
    %c0_i32_1 = arith.constant 0 : i32
    return %arg0, %c0_i32, %c0_i32_0 : i32, i32, i32
  }
  func.func @transform_2(%arg0: i32) -> (i32, i32) {
    %c0_i32 = arith.constant 0 : i32
    %c0_i32_0 = arith.constant 0 : i32
    %c0_i32_1 = arith.constant 0 : i32
    return %c0_i32, %c0_i32_0 : i32, i32
  }
  func.func @transform_3(%arg0: i32) -> (i32, i32, i32) {
    %c0_i32 = arith.constant 0 : i32
    %c0_i32_0 = arith.constant 0 : i32
    %c0_i32_1 = arith.constant 0 : i32
    return %arg0, %c0_i32, %c0_i32_0 : i32, i32, i32
  }
  func.func @transform_4(%arg0: i32) -> (i32, i32, i32) {
    %c0_i32 = arith.constant 0 : i32
    %c0_i32_0 = arith.constant 0 : i32
    %c0_i32_1 = arith.constant 0 : i32
    return %arg0, %c0_i32, %c0_i32_0 : i32, i32, i32
  }
}

module attributes {stable_mosaic.version = 11 : i64} {
  func.func @gcn_pass2_kernel(%arg0: i32, %arg1: memref<32x128xf32, #tpu.memory_space<vmem>>, %arg2: memref<1x128xf32, #tpu.memory_space<vmem>>, %arg3: memref<1x128xf32, #tpu.memory_space<vmem>>, %arg4: memref<32x128xf32, #tpu.memory_space<vmem>>) attributes {dimension_semantics = [#tpu.dimension_semantics<parallel>], iteration_bounds = array<i64: 1>, scalar_prefetch = 0 : i64, scratch_operands = 0 : i64, tpu.core_type = #tpu.core_type<tc>, window_params = [{transform_indices = @transform_0, window_bounds = array<i64: 32, 128>}, {pipeline_mode = #tpu.pipeline_mode<synchronous>, transform_indices = @transform_1, window_bounds = array<i64: 1, 128>}, {pipeline_mode = #tpu.pipeline_mode<synchronous>, transform_indices = @transform_2, window_bounds = array<i64: 1, 128>}, {transform_indices = @transform_3, window_bounds = array<i64: 32, 128>}]} {
    %c0 = arith.constant 0 : index
    %c0_0 = arith.constant 0 : index
    %0 = vector.load %arg1[%c0, %c0_0] : memref<32x128xf32, #tpu.memory_space<vmem>>, vector<32x128xf32>
    %c0_1 = arith.constant 0 : index
    %c0_2 = arith.constant 0 : index
    %1 = vector.load %arg2[%c0_1, %c0_2] : memref<1x128xf32, #tpu.memory_space<vmem>>, vector<1x128xf32>
    %2 = vector.broadcast %1 : vector<1x128xf32> to vector<32x128xf32>
    %3 = arith.mulf %0, %2 : vector<32x128xf32>
    %c0_3 = arith.constant 0 : index
    %c0_4 = arith.constant 0 : index
    %4 = vector.load %arg3[%c0_3, %c0_4] : memref<1x128xf32, #tpu.memory_space<vmem>>, vector<1x128xf32>
    %5 = vector.broadcast %4 : vector<1x128xf32> to vector<32x128xf32>
    %6 = arith.addf %3, %5 : vector<32x128xf32>
    %cst = arith.constant 0.000000e+00 : f32
    %7 = vector.broadcast %cst : f32 to vector<32x128xf32>
    %8 = arith.maximumf %6, %7 : vector<32x128xf32>
    %c0_5 = arith.constant 0 : index
    %c0_6 = arith.constant 0 : index
    %9 = vector.load %arg4[%c0_5, %c0_6] : memref<32x128xf32, #tpu.memory_space<vmem>>, vector<32x128xf32>
    tpu.vector_store %arg4[%c0_5, %c0_6], %8 {strides = array<i32>} : memref<32x128xf32, #tpu.memory_space<vmem>>, vector<32x128xf32>,
    return
  }
  func.func @transform_0(%arg0: i32) -> (i32, i32) {
    %c0_i32 = arith.constant 0 : i32
    %c0_i32_0 = arith.constant 0 : i32
    return %arg0, %c0_i32 : i32, i32
  }
  func.func @transform_1(%arg0: i32) -> (i32, i32) {
    %c0_i32 = arith.constant 0 : i32
    %c0_i32_0 = arith.constant 0 : i32
    %c0_i32_1 = arith.constant 0 : i32
    return %c0_i32, %c0_i32_0 : i32, i32
  }
  func.func @transform_2(%arg0: i32) -> (i32, i32) {
    %c0_i32 = arith.constant 0 : i32
    %c0_i32_0 = arith.constant 0 : i32
    %c0_i32_1 = arith.constant 0 : i32
    return %c0_i32, %c0_i32_0 : i32, i32
  }
  func.func @transform_3(%arg0: i32) -> (i32, i32) {
    %c0_i32 = arith.constant 0 : i32
    %c0_i32_0 = arith.constant 0 : i32
    return %arg0, %c0_i32 : i32, i32
  }
}

</mosaic_0001>

<llo_original>
// kernel: gcn_forward.3
$region0: #{gcn_forward.3}
  #allocation0 [shape = 'u32[]', space=smem, size = 0x4, offset = 0x4, fixed_abs, tag = 'smem constant byte address 0x4 - core index']
  #allocation1 [shape = 'u32[144,128]{1,0:T(1,128)}', space=vmem, size = 0x12000, scoped, tag = 'internal scratch']
  %s0 = inlined_call_operand.vmem [shape: f32[32,128], index: 0, kind: input, shape index: {}]
  %s1 = inlined_call_operand.vmem [shape: f32[1,128], index: 1, kind: input, shape index: {}]
  %s2 = inlined_call_operand.vmem [shape: f32[1,128], index: 2, kind: input, shape index: {}]
  %s3 = inlined_call_operand.hbm [shape: f32[32,128], index: 3, kind: output, shape index: {}]
  %s4 = sld [smem:[#allocation0]]
  $region22: #{gcn_forward.3} parent=0
    _
  %s6 = ssub.s32 1, %s4
  %s7 = scalar_select 0, %s6, %s4
  $region1: #{gcn_forward.3} parent=0
    #allocation2 [shape = 'u8[16384]{0}', space=vmem, size = 0x4000, scoped, tag = 'output window, operand 0, single buffered']
    #allocation3 [shape = 's32[1]{0}', space=sflag, size = 0x4, scoped, tag = 'scoped memory for gcn_forward.3']
    %8 = vsyncpa [#allocation3], 0
    // Predicated region
    $region2: #{gcn_forward.3} parent=1 // pred_check
      _
    $region3: #{gcn_forward.3} parent=1 // pred_check_branch
      %10 = sbr.rel (0) target = $region5
    $region4: #{gcn_forward.3} parent=1 // pred_region
      _
    $region5: #{gcn_forward.3} parent=1 // pred_fallthru
      _
    // Predicated region
    $region6: #{gcn_forward.3} parent=1 // pred_check
      _
    $region7: #{gcn_forward.3} parent=1 // pred_check_branch
      %12 = sbr.rel (0) target = $region9
    $region8: #{gcn_forward.3} parent=1 // pred_region
      _
    $region9: #{gcn_forward.3} parent=1 // pred_fallthru
      _
    // Predicated region
    $region10: #{gcn_forward.3} parent=1 // pred_check
      _
    $region11: #{gcn_forward.3} parent=1 // pred_check_branch
      %14 = sbr.rel (0) target = $region13
    $region12: #{gcn_forward.3} parent=1 // pred_region
      _
    $region13: #{gcn_forward.3} parent=1 // pred_fallthru
      _
    %v15 = vld [vmem:[%s0] sm:$0xff]
    %v16 = vld [vmem:[%s0 + $0x8] sm:$0xff]
    %v17 = vld [vmem:[%s0 + $0x10] sm:$0xff]
    %v18 = vld [vmem:[%s0 + $0x18] sm:$0xff]
    %v19 = vld [vmem:[%s1] sm:$0x1]
    %v21 = vlaneseq
    %v22 = vshrl.u32 %v21, 7
    %v23 = vsub.s32 0, %v22
    %v24 = vrot.slane %v19, %v23
    %v26 = vmul.f32 %v15, %v24
    %v27 = vmul.f32 %v16, %v24
    %v28 = vmul.f32 %v17, %v24
    %v29 = vmul.f32 %v18, %v24
    %v30 = vld [vmem:[%s2] sm:$0x1]
    %v32 = vlaneseq
    %v33 = vshrl.u32 %v32, 7
    %v34 = vsub.s32 0, %v33
    %v35 = vrot.slane %v30, %v34
    %v37 = vadd.f32 %v26, %v35
    %v38 = vadd.f32 %v27, %v35
    %v39 = vadd.f32 %v28, %v35
    %v40 = vadd.f32 %v29, %v35
    %v41 = vmax.f32 %v37, 0.0
    %v42 = vmax.f32 %v38, 0.0
    %v43 = vmax.f32 %v39, 0.0
    %v44 = vmax.f32 %v40, 0.0
    %45 = vst [vmem:[#allocation2] sm:$0xff] %v41
    %46 = vst [vmem:[#allocation2 + $0x8] sm:$0xff] %v42
    %47 = vst [vmem:[#allocation2 + $0x10] sm:$0xff] %v43
    %48 = vst [vmem:[#allocation2 + $0x18] sm:$0xff] %v44
    // Predicated region
    $region14: #{gcn_forward.3} parent=1 // pred_check
      _
    $region15: #{gcn_forward.3} parent=1 // pred_check_branch
      %50 = sbr.rel (0) target = $region17
    $region16: #{gcn_forward.3} parent=1 // pred_region
      %s52 = ssub.s32 512, 512
      %53 = vsyncadd [#allocation3], %s52
      %s54 = sshll.u32 [#allocation2], 4
      %s55 = int_to_ptr.vmem [resolvable:$true] %s54
      %60 = dma.vmem_to_hbm [thread:$0]  %s55, 512, %s3, [#allocation3], 128, 128, 8
    $region17: #{gcn_forward.3} parent=1 // pred_fallthru
      _
    // Predicated region
    $region18: #{gcn_forward.3} parent=1 // pred_check
      _
    $region19: #{gcn_forward.3} parent=1 // pred_check_branch
      %62 = sbr.rel (0) target = $region21
    $region20: #{gcn_forward.3} parent=1 // pred_region
      %63 = dma.done [#allocation3], 512
    $region21: #{gcn_forward.3} parent=1 // pred_fallthru
      _
    %64 = vsyncpa [#allocation3], 1

// kernel: gcn_forward.2
$region0: #{gcn_forward.2}
  #allocation0 [shape = 'u32[]', space=smem, size = 0x4, offset = 0x4, fixed_abs, tag = 'smem constant byte address 0x4 - core index']
  #allocation1 [shape = 'u32[144,128]{1,0:T(1,128)}', space=vmem, size = 0x12000, scoped, tag = 'internal scratch']
  %s0 = inlined_call_operand.vmem [shape: f32[2,16,9], index: 0, kind: input, shape index: {}]
  %s1 = inlined_call_operand.vmem [shape: f32[2,16,16], index: 1, kind: input, shape index: {}]
  %s2 = inlined_call_operand.vmem [shape: f32[9,128], index: 2, kind: input, shape index: {}]
  %s3 = inlined_call_operand.vmem [shape: f32[2,16,128], index: 3, kind: output, shape index: {0}]
  %s4 = inlined_call_operand.vmem [shape: f32[2,2,128], index: 4, kind: output, shape index: {1}]
  %5 = xla_tuple %s3, %s4
  %s6 = sld [smem:[#allocation0]]
  $region53: #{gcn_forward.2} parent=0
    _
  %s8 = ssub.s32 1, %s6
  %s9 = scalar_select 0, %s8, %s6
  loop: start=0, step=1, limit=4
  $region2: #{gcn_forward.2} parent=0 // loop_pre_header
    _
  $region3: #{gcn_forward.2} parent=0 // loop_header
    %s11 = sphi 0, %s15
    %p12 = scmp.ge.s32.totalorder %s11, 4
    %s21 = sphi 0, %s23
    %s24 = sphi 0, %s21
    %s25 = sphi 0, %s24
    %s41 = sphi 0, %s25
    %s47 = sphi 0, %s49
    %s50 = sphi 0, %s47
    %s51 = sphi 0, %s50
    %s67 = sphi 0, %s51
    %s71 = sphi 0, %s71
    %s73 = sphi 0, %s71
    %s74 = sphi 0, %s73
    %s88 = sphi 0, %s74
    %s94 = sphi 0, %s96
    %s97 = sphi 0, %s94
    %s98 = sphi 0, %s97
    %s114 = sphi 0, %s98
    %s120 = sphi 0, %s122
    %s123 = sphi 0, %s120
    %s124 = sphi 0, %s123
    %s140 = sphi 0, %s124
  $region4: #{gcn_forward.2} parent=0 // loop_header_branch
    %14 = sbr.rel (%p12) target = $region8
  $region5: #{gcn_forward.2} parent=0 // loop_body
    %s16 = ssub.s32 %s11, 1
    %s17 = ssub.s32 %s11, 2
    %s18 = sadd.s32 %s11, 1
    %s19 = ssub.s32 %s11, %s18
    %p20 = scmp.eq.s32.totalorder %s19, 0
    %s22 = sadd.s32 %s21, 1
    %s23 = scalar_select %p20, %s21, %s22
    %p26 = pneg %p20
    %p27 = scmp.eq.s32.totalorder %s11, 1
    %p28 = por %p26, %p27
    %p29 = scmp.ne.s32.totalorder %s21, %s24
    %p30 = scmp.eq.s32.totalorder %s11, 0
    %p31 = por %p29, %p30
    %p32 = scmp.ne.s32.totalorder %s21, %s24
    %p33 = scmp.eq.s32.totalorder %s16, 1
    %p34 = por %p32, %p33
    %p35 = scmp.ne.s32.totalorder %s24, %s25
    %p36 = scmp.eq.s32.totalorder %s16, 0
    %p37 = por %p35, %p36
    %p38 = scmp.ne.s32.totalorder %s24, %s25
    %p39 = scmp.eq.s32.totalorder %s17, 1
    %p40 = por %p38, %p39
    %p42 = scmp.ne.s32.totalorder %s25, %s41
    %p43 = scmp.eq.s32.totalorder %s17, 0
    %p44 = por %p42, %p43
    %s45 = ssub.s32 %s11, %s18
    %p46 = scmp.eq.s32.totalorder %s45, 0
    %s48 = sadd.s32 %s47, 1
    %s49 = scalar_select %p46, %s47, %s48
    %p52 = pneg %p46
    %p53 = scmp.eq.s32.totalorder %s11, 1
    %p54 = por %p52, %p53
    %p55 = scmp.ne.s32.totalorder %s47, %s50
    %p56 = scmp.eq.s32.totalorder %s11, 0
    %p57 = por %p55, %p56
    %p58 = scmp.ne.s32.totalorder %s47, %s50
    %p59 = scmp.eq.s32.totalorder %s16, 1
    %p60 = por %p58, %p59
    %p61 = scmp.ne.s32.totalorder %s50, %s51
    %p62 = scmp.eq.s32.totalorder %s16, 0
    %p63 = por %p61, %p62
    %p64 = scmp.ne.s32.totalorder %s50, %s51
    %p65 = scmp.eq.s32.totalorder %s17, 1
    %p66 = por %p64, %p65
    %p68 = scmp.ne.s32.totalorder %s51, %s67
    %p69 = scmp.eq.s32.totalorder %s17, 0
    %p70 = por %p68, %p69
    %s72 = sadd.s32 %s71, 1
    %p75 = scmp.eq.s32.totalorder %s11, 1
    %p76 = scmp.ne.s32.totalorder %s71, %s73
    %p77 = scmp.eq.s32.totalorder %s11, 0
    %p78 = por %p76, %p77
    %p79 = scmp.ne.s32.totalorder %s71, %s73
    %p80 = scmp.eq.s32.totalorder %s16, 1
    %p81 = por %p79, %p80
    %p82 = scmp.ne.s32.totalorder %s73, %s74
    %p83 = scmp.eq.s32.totalorder %s16, 0
    %p84 = por %p82, %p83
    %p85 = scmp.ne.s32.totalorder %s73, %s74
    %p86 = scmp.eq.s32.totalorder %s17, 1
    %p87 = por %p85, %p86
    %p89 = scmp.ne.s32.totalorder %s74, %s88
    %p90 = scmp.eq.s32.totalorder %s17, 0
    %p91 = por %p89, %p90
    %s92 = ssub.s32 %s11, %s18
    %p93 = scmp.eq.s32.totalorder %s92, 0
    %s95 = sadd.s32 %s94, 1
    %s96 = scalar_select %p93, %s94, %s95
    %p99 = pneg %p93
    %p100 = scmp.eq.s32.totalorder %s11, 1
    %p101 = por %p99, %p100
    %p102 = scmp.ne.s32.totalorder %s94, %s97
    %p103 = scmp.eq.s32.totalorder %s11, 0
    %p104 = por %p102, %p103
    %p105 = scmp.ne.s32.totalorder %s94, %s97
    %p106 = scmp.eq.s32.totalorder %s16, 1
    %p107 = por %p105, %p106
    %p108 = scmp.ne.s32.totalorder %s97, %s98
    %p109 = scmp.eq.s32.totalorder %s16, 0
    %p110 = por %p108, %p109
    %p111 = scmp.ne.s32.totalorder %s97, %s98
    %p112 = scmp.eq.s32.totalorder %s17, 1
    %p113 = por %p111, %p112
    %p115 = scmp.ne.s32.totalorder %s98, %s114
    %p116 = scmp.eq.s32.totalorder %s17, 0
    %p117 = por %p115, %p116
    %s118 = ssub.s32 %s11, %s18
    %p119 = scmp.eq.s32.totalorder %s118, 0
    %s121 = sadd.s32 %s120, 1
    %s122 = scalar_select %p119, %s120, %s121
    %p125 = pneg %p119
    %p126 = scmp.eq.s32.totalorder %s11, 1
    %p127 = por %p125, %p126
    %p128 = scmp.ne.s32.totalorder %s120, %s123
    %p129 = scmp.eq.s32.totalorder %s11, 0
    %p130 = por %p128, %p129
    %p131 = scmp.ne.s32.totalorder %s120, %s123
    %p132 = scmp.eq.s32.totalorder %s16, 1
    %p133 = por %p131, %p132
    %p134 = scmp.ne.s32.totalorder %s123, %s124
    %p135 = scmp.eq.s32.totalorder %s16, 0
    %p136 = por %p134, %p135
    %p137 = scmp.ne.s32.totalorder %s123, %s124
    %p138 = scmp.eq.s32.totalorder %s17, 1
    %p139 = por %p137, %p138
    %p141 = scmp.ne.s32.totalorder %s124, %s140
    %p142 = scmp.eq.s32.totalorder %s17, 0
    %p143 = por %p141, %p142
    %p144 = scmp.le.s32.totalorder 1, %s11
    %p145 = scmp.lt.s32.totalorder %s11, 3
    %p146 = pnand %p144, %p145
    %p147 = pneg %p146
    // Predicated region
    $region9: #{gcn_forward.2} parent=5 // pred_check
      _
    $region10: #{gcn_forward.2} parent=5 // pred_check_branch
      %149 = sbr.rel (%p146) target = $region12
    $region11: #{gcn_forward.2} parent=5 // pred_region
      %s150 = ssub.s32 %s11, 1
      // Predicated region
      $region13: #{gcn_forward.2} parent=11 // pred_check
        %p151 = pneg %p84
      $region14: #{gcn_forward.2} parent=11 // pred_check_branch
        %153 = sbr.rel (%p151) target = $region16
      $region15: #{gcn_forward.2} parent=11 // pred_region
        _
      $region16: #{gcn_forward.2} parent=11 // pred_fallthru
        _
    $region12: #{gcn_forward.2} parent=5 // pred_fallthru
      _
    %p154 = scmp.lt.s32.totalorder %s11, 2
    // Predicated region
    $region17: #{gcn_forward.2} parent=5 // pred_check
      %p155 = pneg %p154
    $region18: #{gcn_forward.2} parent=5 // pred_check_branch
      %157 = sbr.rel (%p155) target = $region20
    $region19: #{gcn_forward.2} parent=5 // pred_region
      // Predicated region
      $region21: #{gcn_forward.2} parent=19 // pred_check
        %p158 = pneg %p31
      $region22: #{gcn_forward.2} parent=19 // pred_check_branch
        %160 = sbr.rel (%p158) target = $region24
      $region23: #{gcn_forward.2} parent=19 // pred_region
        %p161 = scmp.lt.s32.totalorder %s11, 1
        %s162 = scalar_select %p161, %s11, 1
        %s163 = smul.addr %s162, 2
        %s164 = smul.addr %s163, 8
        %s165 = scalar_lea.vmem %s0, %s164
      $region24: #{gcn_forward.2} parent=19 // pred_fallthru
        _
      // Predicated region
      $region25: #{gcn_forward.2} parent=19 // pred_check
        %p166 = pneg %p57
      $region26: #{gcn_forward.2} parent=19 // pred_check_branch
        %168 = sbr.rel (%p166) target = $region28
      $region27: #{gcn_forward.2} parent=19 // pred_region
        %p169 = scmp.lt.s32.totalorder %s11, 1
        %s170 = scalar_select %p169, %s11, 1
        %s171 = smul.addr %s170, 2
        %s172 = smul.addr %s171, 8
        %s173 = scalar_lea.vmem %s1, %s172
      $region28: #{gcn_forward.2} parent=19 // pred_fallthru
        _
    $region20: #{gcn_forward.2} parent=5 // pred_fallthru
      _
    %p174 = scmp.le.s32.totalorder 1, %s11
    %p175 = scmp.lt.s32.totalorder %s11, 3
    %p176 = pnand %p174, %p175
    %p177 = pneg %p176
    // Predicated region
    $region29: #{gcn_forward.2} parent=5 // pred_check
      _
    $region30: #{gcn_forward.2} parent=5 // pred_check_branch
      %179 = sbr.rel (%p176) target = $region32
    $region31: #{gcn_forward.2} parent=5 // pred_region
      %s180 = ssub.s32 %s11, 1
      %p181 = scmp.lt.s32.totalorder %s16, 1
      %s182 = scalar_select %p181, %s16, 1
      %s183 = smul.addr %s182, 2
      %s184 = smul.addr %s183, 8
      %s185 = scalar_lea.vmem %s0, %s184
      %p186 = pneg %p37
      %p187 = pneg %p34
      %p188 = scmp.lt.s32.totalorder %s16, 1
      %s189 = scalar_select %p188, %s16, 1
      %s190 = smul.addr %s189, 2
      %s191 = smul.addr %s190, 8
      %s192 = scalar_lea.vmem %s1, %s191
      %p193 = pneg %p63
      %p194 = pneg %p60
      %p195 = pneg %p84
      %p196 = pneg %p81
      %p197 = pneg %p110
      %p198 = pneg %p107
      %p199 = scmp.lt.s32.totalorder %s16, 1
      %s200 = scalar_select %p199, %s16, 1
      %s201 = smul.addr %s200, 2
      %s202 = smul.addr %s201, 8
      %s203 = scalar_lea.vmem %s3, %s202
      %p204 = pneg %p136
      %p205 = pneg %p133
      %p206 = scmp.lt.s32.totalorder %s16, 1
      %s207 = scalar_select %p206, %s16, 1
      %s208 = smul.addr %s207, 2
      %s209 = scalar_lea.vmem %s4, %s208
      %p210 = scmp.lt.s32.totalorder %s16, 1
      %s211 = scalar_select %p210, %s16, 1
      %s212 = smul.addr %s211, 2
      %s213 = smul.addr %s212, 8
      %s214 = scalar_lea.vmem %s0, %s213
      %p215 = scmp.lt.s32.totalorder %s16, 1
      %s216 = scalar_select %p215, %s16, 1
      %s217 = smul.addr %s216, 2
      %s218 = smul.addr %s217, 8
      %s219 = scalar_lea.vmem %s1, %s218
      %p220 = scmp.lt.s32.totalorder %s16, 1
      %s221 = scalar_select %p220, %s16, 1
      %s222 = smul.addr %s221, 2
      %s223 = smul.addr %s222, 8
      %s224 = scalar_lea.vmem %s3, %s223
      %p225 = scmp.lt.s32.totalorder %s16, 1
      %s226 = scalar_select %p225, %s16, 1
      %s227 = smul.addr %s226, 2
      %s228 = scalar_lea.vmem %s4, %s227
      %v229 = vld [vmem:[%s214] sm:$0xff]
      %v230 = vld [vmem:[%s214 + $0x8] sm:$0xff]
      %v231 = vld [vmem:[%s2] sm:$0xff]
      %v232 = vld [vmem:[%s2 + $0x8] sm:$0x1]
      %vm233 = vcmask 72704
      %v235 = vsel %vm233, %v229, 0
      %v238 = vsel %vm233, %v230, 0
      %vm240 = vcmask 1040384
      %v242 = vsel %vm240, %v232, 0
      %244 = vmatprep.subr.mxu0 0.0
      %245 = vmatpush1.msra.mxu0 %v231
      %246 = vmatprep.subr.mxu0 0.0
      %247 = vmatpush1.msra.mxu0 %v242
      %248 = vmatprep.subr.mxu0 0.0
      %249 = vmatpush1.msra.mxu0 0.0
      %250 = vmatprep.subr.mxu0 0.0
      %251 = vmatpush1.msra.mxu0 0.0
      %252 = vmatprep.subr.mxu0 0.0
      %253 = vmatpush1.msra.mxu0 0.0
      %254 = vmatprep.subr.mxu0 0.0
      %255 = vmatpush1.msra.mxu0 0.0
      %256 = vmatprep.subr.mxu0 0.0
      %257 = vmatpush1.msra.mxu0 0.0
      %258 = vmatprep.subr.mxu0 0.0
      %259 = vmatpush1.msra.mxu0 0.0
      %260 = vmatprep.subr.mxu0 0.0
      %261 = vmatpush1.msra.mxu0 0.0
      %262 = vmatprep.subr.mxu0 0.0
      %263 = vmatpush1.msra.mxu0 0.0
      %264 = vmatprep.subr.mxu0 0.0
      %265 = vmatpush1.msra.mxu0 0.0
      %266 = vmatprep.subr.mxu0 0.0
      %267 = vmatpush1.msra.mxu0 0.0
      %268 = vmatprep.subr.mxu0 0.0
      %269 = vmatpush1.msra.mxu0 0.0
      %270 = vmatprep.subr.mxu0 0.0
      %271 = vmatpush1.msra.mxu0 0.0
      %272 = vmatprep.subr.mxu0 0.0
      %273 = vmatpush1.msra.mxu0 0.0
      %274 = vmatprep.subr.mxu0 0.0
      %275 = vmatpush1.msra.mxu0 0.0
      %276 = vmatprep.subr.mxu0 0.0
      %277 = vmatpush1.msra.mxu0 0.0
      %278 = vmatprep.subr.mxu0 0.0
      %279 = vmatpush1.msra.mxu0 0.0
      %280 = vmatprep.subr.mxu0 0.0
      %281 = vmatpush1.msra.mxu0 0.0
      %282 = vmatprep.subr.mxu0 0.0
      %283 = vmatpush1.msra.mxu0 0.0
      %284 = vmatprep.subr.mxu0 0.0
      %285 = vmatpush1.msra.mxu0 0.0
      %286 = vmatprep.subr.mxu0 0.0
      %287 = vmatpush1.msra.mxu0 0.0
      %288 = vmatprep.subr.mxu0 0.0
      %289 = vmatpush1.msra.mxu0 0.0
      %290 = vmatprep.subr.mxu0 0.0
      %291 = vmatpush1.msra.mxu0 0.0
      %292 = vmatprep.subr.mxu0 0.0
      %293 = vmatpush1.msra.mxu0 0.0
      %294 = vmatprep.subr.mxu0 0.0
      %295 = vmatpush1.msra.mxu0 0.0
      %296 = vmatprep.subr.mxu0 0.0
      %297 = vmatpush1.msra.mxu0 0.0
      %298 = vmatprep.subr.mxu0 0.0
      %299 = vmatpush1.msra.mxu0 0.0
      %300 = vmatprep.subr.mxu0 0.0
      %301 = vmatpush1.msra.mxu0 0.0
      %302 = vmatprep.subr.mxu0 0.0
      %303 = vmatpush1.msra.mxu0 0.0
      %304 = vmatprep.subr.mxu0 0.0
      %305 = vmatpush1.msra.mxu0 0.0
      %306 = vmatprep.subr.mxu0 0.0
      %307 = vmatpush1.msra.mxu0 0.0
      %308 = vmatprep.mubr.f32.mxu0 0.0
      %309 = vmatmul.mubr.f32.gmra.mrb[0].mxu0 %v235
      %v310 = vpop.f32.mrb[0].mxu0
      %v311 = vadd.f32 0.0, %v310
      %v312 = vpop.f32.mrb[0].mxu0
      %313 = vmatprep.mubr.f32.mxu0 0.0
      %314 = vmatmul.mubr.f32.gmra.mrb[0].mxu0 %v238
      %v315 = vpop.f32.mrb[0].mxu0
      %v316 = vadd.f32 0.0, %v315
      %v317 = vpop.f32.mrb[0].mxu0
      %318 = vdwg.mxu0
      %v319 = vld [vmem:[%s219] sm:$0xff]
      %v320 = vld [vmem:[%s219 + $0x8] sm:$0xff]
      %vm321 = vcmask 130048
      %v322 = vsel %vm321, %v319, 0.0
      %323 = vadd.xlane.f32.xlu0 %v322
      %v324 = vpop.xlane.xlu0 %323
      %v325 = vsel %vm321, %v320, 0.0
      %326 = vadd.xlane.f32.xlu0 %v325
      %v327 = vpop.xlane.xlu0 %326
      %v328 = vadd.f32 %v324, 1.0
      %v329 = vadd.f32 %v327, 1.0
      %v330 = vlaneseq
      %v331 = vshrl.u32 %v330, 7
      %v332 = vadd.s32 %v331, 8
      %v333 = vlaneseq
      %v334 = vand.u32 %v333, 127
      %vm335 = vcmp.eq.s32.totalorder %v331, %v334
      %vm336 = vcmp.eq.s32.totalorder %v332, %v334
      %v337 = vsel %vm335, 1, 0
      %v338 = vsel %vm336, 1, 0
      %v339 = vcvt.s32.f32 %v337
      %v340 = vcvt.s32.f32 %v338
      %v341 = vadd.f32 %v319, %v339
      %v342 = vadd.f32 %v320, %v340
      %v343 = vrcp.pop %v328
      %v344 = vmul.f32 1.0, %v343
      %v345 = vrcp.pop %v329
      %v346 = vmul.f32 1.0, %v345
      %v347 = vmul.f32 %v341, %v344
      %v348 = vmul.f32 %v342, %v346
      %v350 = vsel %vm321, %v347, 0
      %v353 = vsel %vm321, %v348, 0
      %355 = vmatprep.subr.mxu0 0.0
      %356 = vmatpush1.msra.mxu0 %v311
      %357 = vmatprep.subr.mxu0 0.0
      %358 = vmatpush1.msra.mxu0 %v316
      %359 = vmatprep.subr.mxu0 0.0
      %360 = vmatpush1.msra.mxu0 0.0
      %361 = vmatprep.subr.mxu0 0.0
      %362 = vmatpush1.msra.mxu0 0.0
      %363 = vmatprep.subr.mxu0 0.0
      %364 = vmatpush1.msra.mxu0 0.0
      %365 = vmatprep.subr.mxu0 0.0
      %366 = vmatpush1.msra.mxu0 0.0
      %367 = vmatprep.subr.mxu0 0.0
      %368 = vmatpush1.msra.mxu0 0.0
      %369 = vmatprep.subr.mxu0 0.0
      %370 = vmatpush1.msra.mxu0 0.0
      %371 = vmatprep.subr.mxu0 0.0
      %372 = vmatpush1.msra.mxu0 0.0
      %373 = vmatprep.subr.mxu0 0.0
      %374 = vmatpush1.msra.mxu0 0.0
      %375 = vmatprep.subr.mxu0 0.0
      %376 = vmatpush1.msra.mxu0 0.0
      %377 = vmatprep.subr.mxu0 0.0
      %378 = vmatpush1.msra.mxu0 0.0
      %379 = vmatprep.subr.mxu0 0.0
      %380 = vmatpush1.msra.mxu0 0.0
      %381 = vmatprep.subr.mxu0 0.0
      %382 = vmatpush1.msra.mxu0 0.0
      %383 = vmatprep.subr.mxu0 0.0
      %384 = vmatpush1.msra.mxu0 0.0
      %385 = vmatprep.subr.mxu0 0.0
      %386 = vmatpush1.msra.mxu0 0.0
      %387 = vmatprep.subr.mxu0 0.0
      %388 = vmatpush1.msra.mxu0 0.0
      %389 = vmatprep.subr.mxu0 0.0
      %390 = vmatpush1.msra.mxu0 0.0
      %391 = vmatprep.subr.mxu0 0.0
      %392 = vmatpush1.msra.mxu0 0.0
      %393 = vmatprep.subr.mxu0 0.0
      %394 = vmatpush1.msra.mxu0 0.0
      %395 = vmatprep.subr.mxu0 0.0
      %396 = vmatpush1.msra.mxu0 0.0
      %397 = vmatprep.subr.mxu0 0.0
      %398 = vmatpush1.msra.mxu0 0.0
      %399 = vmatprep.subr.mxu0 0.0
      %400 = vmatpush1.msra.mxu0 0.0
      %401 = vmatprep.subr.mxu0 0.0
      %402 = vmatpush1.msra.mxu0 0.0
      %403 = vmatprep.subr.mxu0 0.0
      %404 = vmatpush1.msra.mxu0 0.0
      %405 = vmatprep.subr.mxu0 0.0
      %406 = vmatpush1.msra.mxu0 0.0
      %407 = vmatprep.subr.mxu0 0.0
      %408 = vmatpush1.msra.mxu0 0.0
      %409 = vmatprep.subr.mxu0 0.0
      %410 = vmatpush1.msra.mxu0 0.0
      %411 = vmatprep.subr.mxu0 0.0
      %412 = vmatpush1.msra.mxu0 0.0
      %413 = vmatprep.subr.mxu0 0.0
      %414 = vmatpush1.msra.mxu0 0.0
      %415 = vmatprep.subr.mxu0 0.0
      %416 = vmatpush1.msra.mxu0 0.0
      %417 = vmatprep.subr.mxu0 0.0
      %418 = vmatpush1.msra.mxu0 0.0
      %419 = vmatprep.mubr.f32.mxu0 0.0
      %420 = vmatmul.mubr.f32.gmra.mrb[0].mxu0 %v350
      %v421 = vpop.f32.mrb[0].mxu0
      %v422 = vadd.f32 0.0, %v421
      %v423 = vpop.f32.mrb[0].mxu0
      %424 = vmatprep.mubr.f32.mxu0 0.0
      %425 = vmatmul.mubr.f32.gmra.mrb[0].mxu0 %v353
      %v426 = vpop.f32.mrb[0].mxu0
      %v427 = vadd.f32 0.0, %v426
      %v428 = vpop.f32.mrb[0].mxu0
      %429 = vdwg.mxu0
      %430 = vst [vmem:[%s224] sm:$0xff] %v422
      %431 = vst [vmem:[%s224 + $0x8] sm:$0xff] %v427
      %v432 = vadd.f32 %v422, %v427
      %v433 = vrot.slane %v432, 4
      %v434 = vadd.f32 %v432, %v433
      %v435 = vrot.slane %v434, 2
      %v436 = vadd.f32 %v434, %v435
      %v437 = vrot.slane %v436, 1
      %v438 = vadd.f32 %v436, %v437
      %439 = vst [vmem:[%s228] sm:$0x1] %v438
      %v440 = vmul.f32 %v422, %v422
      %v441 = vmul.f32 %v427, %v427
      %v442 = vadd.f32 %v440, %v441
      %v443 = vrot.slane %v442, 4
      %v444 = vadd.f32 %v442, %v443
      %v445 = vrot.slane %v444, 2
      %v446 = vadd.f32 %v444, %v445
      %v447 = vrot.slane %v446, 1
      %v448 = vadd.f32 %v446, %v447
      %449 = vst [vmem:[%s228 + $0x1] sm:$0x1] %v448
      %p450 = scmp.lt.s32.totalorder %s16, 1
      %s451 = scalar_select %p450, %s16, 1
      %s452 = smul.addr %s451, 2
      %s453 = smul.addr %s452, 8
      %s454 = scalar_lea.vmem %s3, %s453
      %p455 = scmp.lt.s32.totalorder %s16, 1
      %s456 = scalar_select %p455, %s16, 1
      %s457 = smul.addr %s456, 2
      %s458 = scalar_lea.vmem %s4, %s457
      // Predicated region
      $region33: #{gcn_forward.2} parent=31 // pred_check
        %p459 = pneg %p107
      $region34: #{gcn_forward.2} parent=31 // pred_check_branch
        %461 = sbr.rel (%p459) target = $region36
      $region35: #{gcn_forward.2} parent=31 // pred_region
        _
      $region36: #{gcn_forward.2} parent=31 // pred_fallthru
        _
      // Predicated region
      $region37: #{gcn_forward.2} parent=31 // pred_check
        %p462 = pneg %p133
      $region38: #{gcn_forward.2} parent=31 // pred_check_branch
        %464 = sbr.rel (%p462) target = $region40
      $region39: #{gcn_forward.2} parent=31 // pred_region
        _
      $region40: #{gcn_forward.2} parent=31 // pred_fallthru
        _
    $region32: #{gcn_forward.2} parent=5 // pred_fallthru
      _
    %p465 = scmp.le.s32.totalorder 2, %s11
    // Predicated region
    $region41: #{gcn_forward.2} parent=5 // pred_check
      %p466 = pneg %p465
    $region42: #{gcn_forward.2} parent=5 // pred_check_branch
      %468 = sbr.rel (%p466) target = $region44
    $region43: #{gcn_forward.2} parent=5 // pred_region
      %s469 = ssub.s32 %s11, 2
      // Predicated region
      $region45: #{gcn_forward.2} parent=43 // pred_check
        %p470 = pneg %p113
      $region46: #{gcn_forward.2} parent=43 // pred_check_branch
        %472 = sbr.rel (%p470) target = $region48
      $region47: #{gcn_forward.2} parent=43 // pred_region
        %p473 = scmp.lt.s32.totalorder %s17, 1
        %s474 = scalar_select %p473, %s17, 1
        %s475 = smul.addr %s474, 2
        %s476 = smul.addr %s475, 8
        %s477 = scalar_lea.vmem %s3, %s476
      $region48: #{gcn_forward.2} parent=43 // pred_fallthru
        _
      // Predicated region
      $region49: #{gcn_forward.2} parent=43 // pred_check
        %p478 = pneg %p139
      $region50: #{gcn_forward.2} parent=43 // pred_check_branch
        %480 = sbr.rel (%p478) target = $region52
      $region51: #{gcn_forward.2} parent=43 // pred_region
        %p481 = scmp.lt.s32.totalorder %s17, 1
        %s482 = scalar_select %p481, %s17, 1
        %s483 = smul.addr %s482, 2
        %s484 = scalar_lea.vmem %s4, %s483
      $region52: #{gcn_forward.2} parent=43 // pred_fallthru
        _
    $region44: #{gcn_forward.2} parent=5 // pred_fallthru
      _
  $region6: #{gcn_forward.2} parent=0 // loop_footer
    %s15 = sadd.s32 1, %s11
  $region7: #{gcn_forward.2} parent=0 // loop_footer_branch
    %10 = sbr.rel target = $region3
  $region8: #{gcn_forward.2} parent=0 // loop_exit
    _

</llo_original>
